<compile_context>
chip_gen: v5e
topology: v5e:2x2
jax: 0.10.0
libtpu: 0.0.40
codegen_flags: <defaults>
</compile_context>

<pallas_src>
import jax
import jax.numpy as jnp
from jax.experimental import pallas as pl
from jax.experimental.pallas import tpu as pltpu


def conv1x1_relu_kernel(w_ref, b_ref, x_ref, o_ref):
    # w_ref: SMEM (C_out, C_in) f32   b_ref: SMEM (C_out,) f32
    # x_ref: VMEM (C_in, TP)    f32   o_ref: VMEM (C_out, TP) f32
    c_out, c_in = w_ref.shape
    x = x_ref[...]                                    # one whole-tile load (C_in, TP)
    for o in range(c_out):                            # static unroll (C_out == 1)
        y = x[0:1, :] * w_ref[o, 0]                   # (1, TP) scalar*vector on VPU
        for c in range(1, c_in):
            y = y + x[c:c + 1, :] * w_ref[o, c]
        y = y + b_ref[o]
        o_ref[pl.ds(o, 1), :] = jnp.maximum(y, 0.0).astype(o_ref.dtype)


def conv1x1_relu(x_nchw, weight, bias, *, max_tile_p=32768):
    """1x1 conv (stride 1, no pad) + ReLU, NCHW in / NCHW out.

    x_nchw: (N, C_in, H, W) float32
    weight: (C_out, C_in) or (C_out, C_in, 1, 1) float32
    bias:   (C_out,) float32
    returns (N, C_out, H, W) float32
    """
    N, C_in, H, W = x_nchw.shape
    w = jnp.asarray(weight, jnp.float32).reshape(weight.shape[0], C_in)
    b = jnp.asarray(bias, jnp.float32).reshape(-1)
    C_out = w.shape[0]
    P = H * W

    # Free reshape (no data movement): channel stays the sublane axis,
    # pixels become the lane axis.
    x_flat = x_nchw.reshape(N, C_in, P)

    # Lane-dense tile along the pixel axis: full extent if it fits, otherwise a
    # large multiple of 128.  A partial last block (P not a multiple of tile_p)
    # is fine for this elementwise-style op: padded reads, OOB writes dropped.
    if P <= max_tile_p:
        tile_p = P
    else:
        tile_p = (max_tile_p // 128) * 128
    n_pt = pl.cdiv(P, tile_p)

    flops = N * P * C_out * (2 * C_in + 1)                       # FMAs + bias/relu
    bytes_accessed = 4 * (N * P * (C_in + C_out) + C_out * C_in + C_out)

    out_flat = pl.pallas_call(
        conv1x1_relu_kernel,
        out_shape=jax.ShapeDtypeStruct((N, C_out, P), jnp.float32),
        grid_spec=pltpu.PrefetchScalarGridSpec(
            num_scalar_prefetch=0,
            grid=(N, n_pt),
            in_specs=[
                # tiny parameter tensors live in SMEM, resident for the whole grid
                pl.BlockSpec(memory_space=pltpu.MemorySpace.SMEM),   # w (C_out, C_in)
                pl.BlockSpec(memory_space=pltpu.MemorySpace.SMEM),   # b (C_out,)
                # activations: (C_in, tile_p) lane-dense blocks
                pl.BlockSpec((None, C_in, tile_p), lambda n, j: (n, 0, j)),
            ],
            out_specs=pl.BlockSpec((None, C_out, tile_p), lambda n, j: (n, 0, j)),
        ),
        compiler_params=pltpu.CompilerParams(
            dimension_semantics=("parallel", "parallel"),
            vmem_limit_bytes=32 * 1024 * 1024,   # safe on v5e/v6e (128 MiB) and v7x (64 MiB)
        ),
        cost_estimate=pl.CostEstimate(
            flops=flops, transcendentals=0, bytes_accessed=bytes_accessed),
    )(w, b, x_flat)

    return out_flat.reshape(N, C_out, H, W)


if __name__ == "__main__":
    key = jax.random.PRNGKey(0)
    k_x, k_w, k_b = jax.random.split(key, 3)

    # Module: Conv2d(3 -> 1, kernel_size=1, stride=1, padding=0) + ReLU
    N, C_in, H, W = 2, 3, 16, 16
    C_out = 1

    x = jax.random.normal(k_x, (N, C_in, H, W), dtype=jnp.float32)
    weight = jax.random.normal(k_w, (C_out, C_in), dtype=jnp.float32) * 0.5
    bias = jax.random.normal(k_b, (C_out,), dtype=jnp.float32) * 0.1

    out = conv1x1_relu(x, weight, bias)
    out = jax.block_until_ready(out)

    # mirror the module's print of the output size (host-side, like PyTorch's print)
    print("out.size() ", out.shape)

    # pure-JAX reference check (1x1 conv == einsum over channels)
    ref = jnp.einsum("nchw,oc->nohw", x, weight) + bias.reshape(1, C_out, 1, 1)
    ref = jnp.maximum(ref, 0.0)
    assert out.shape == (N, C_out, H, W)
    assert jnp.allclose(out, ref, atol=1e-5, rtol=1e-5)

    print("KERNEL_OK")
</pallas_src>

<mosaic_0001>
module attributes {stable_mosaic.version = 11 : i64} {
  func.func @conv1x1_relu_kernel(%arg0: i32, %arg1: i32, %arg2: memref<1x3xf32, #tpu.memory_space<smem>>, %arg3: memref<1xf32, #tpu.memory_space<smem>>, %arg4: memref<1x3x256xf32, #tpu.memory_space<vmem>>, %arg5: memref<1x1x256xf32, #tpu.memory_space<vmem>>) attributes {dimension_semantics = [#tpu.dimension_semantics<parallel>, #tpu.dimension_semantics<parallel>], iteration_bounds = array<i64: 2, 1>, scalar_prefetch = 0 : i64, scratch_operands = 0 : i64, tpu.core_type = #tpu.core_type<tc>, window_params = [{transform_indices = @transform_0, window_bounds = array<i64: 1, 3>}, {transform_indices = @transform_1, window_bounds = array<i64: 1>}, {transform_indices = @transform_2, window_bounds = array<i64: 1, 3, 256>}, {transform_indices = @transform_3, window_bounds = array<i64: 1, 1, 256>}]} {
    %c0 = arith.constant 0 : index
    %c0_0 = arith.constant 0 : index
    %c0_1 = arith.constant 0 : index
    %0 = vector.load %arg4[%c0, %c0_0, %c0_1] : memref<1x3x256xf32, #tpu.memory_space<vmem>>, vector<1x3x256xf32>
    %1 = vector.shape_cast %0 : vector<1x3x256xf32> to vector<3x256xf32>
    %2 = vector.extract_strided_slice %1 {offsets = [0, 0], sizes = [1, 256], strides = [1, 1]} : vector<3x256xf32> to vector<1x256xf32>
    %c0_2 = arith.constant 0 : index
    %c0_3 = arith.constant 0 : index
    %3 = memref.load %arg2[%c0_2, %c0_3] : memref<1x3xf32, #tpu.memory_space<smem>>
    %4 = vector.broadcast %3 : f32 to vector<1x256xf32>
    %5 = arith.mulf %2, %4 : vector<1x256xf32>
    %6 = vector.extract_strided_slice %1 {offsets = [1, 0], sizes = [1, 256], strides = [1, 1]} : vector<3x256xf32> to vector<1x256xf32>
    %c0_4 = arith.constant 0 : index
    %c1 = arith.constant 1 : index
    %7 = memref.load %arg2[%c0_4, %c1] : memref<1x3xf32, #tpu.memory_space<smem>>
    %8 = vector.broadcast %7 : f32 to vector<1x256xf32>
    %9 = arith.mulf %6, %8 : vector<1x256xf32>
    %10 = arith.addf %5, %9 : vector<1x256xf32>
    %11 = vector.extract_strided_slice %1 {offsets = [2, 0], sizes = [1, 256], strides = [1, 1]} : vector<3x256xf32> to vector<1x256xf32>
    %c0_5 = arith.constant 0 : index
    %c2 = arith.constant 2 : index
    %12 = memref.load %arg2[%c0_5, %c2] : memref<1x3xf32, #tpu.memory_space<smem>>
    %13 = vector.broadcast %12 : f32 to vector<1x256xf32>
    %14 = arith.mulf %11, %13 : vector<1x256xf32>
    %15 = arith.addf %10, %14 : vector<1x256xf32>
    %c0_6 = arith.constant 0 : index
    %16 = memref.load %arg3[%c0_6] : memref<1xf32, #tpu.memory_space<smem>>
    %17 = vector.broadcast %16 : f32 to vector<1x256xf32>
    %18 = arith.addf %15, %17 : vector<1x256xf32>
    %cst = arith.constant 0.000000e+00 : f32
    %19 = vector.broadcast %cst : f32 to vector<1x256xf32>
    %20 = arith.maximumf %18, %19 : vector<1x256xf32>
    %c0_7 = arith.constant 0 : index
    %c0_8 = arith.constant 0 : index
    %c0_9 = arith.constant 0 : index
    %21 = vector.load %arg5[%c0_7, %c0_8, %c0_9] : memref<1x1x256xf32, #tpu.memory_space<vmem>>, vector<1x1x256xf32>
    %22 = vector.shape_cast %21 : vector<1x1x256xf32> to vector<1x256xf32>
    %23 = vector.shape_cast %20 : vector<1x256xf32> to vector<1x1x256xf32>
    tpu.vector_store %arg5[%c0_7, %c0_8, %c0_9], %23 {strides = array<i32>} : memref<1x1x256xf32, #tpu.memory_space<vmem>>, vector<1x1x256xf32>,
    return
  }
  func.func @transform_0(%arg0: i32, %arg1: i32) -> (i32, i32) {
    %c0_i32 = arith.constant 0 : i32
    %c0_i32_0 = arith.constant 0 : i32
    %c0_i32_1 = arith.constant 0 : i32
    return %c0_i32, %c0_i32_0 : i32, i32
  }
  func.func @transform_1(%arg0: i32, %arg1: i32) -> i32 {
    %c0_i32 = arith.constant 0 : i32
    %c0_i32_0 = arith.constant 0 : i32
    return %c0_i32 : i32
  }
  func.func @transform_2(%arg0: i32, %arg1: i32) -> (i32, i32, i32) {
    %c0_i32 = arith.constant 0 : i32
    %c0_i32_0 = arith.constant 0 : i32
    return %arg0, %c0_i32, %arg1 : i32, i32, i32
  }
  func.func @transform_3(%arg0: i32, %arg1: i32) -> (i32, i32, i32) {
    %c0_i32 = arith.constant 0 : i32
    %c0_i32_0 = arith.constant 0 : i32
    return %arg0, %c0_i32, %arg1 : i32, i32, i32
  }
}

</mosaic_0001>

<llo_original>
// kernel: tpu_custom_call.1
$region0: #{tpu_custom_call.1}
  #allocation0 [shape = 'u32[]', space=smem, size = 0x4, offset = 0x4, fixed_abs, tag = 'smem constant byte address 0x4 - core index']
  #allocation1 [shape = 'u32[72,128]{1,0:T(1,128)}', space=vmem, size = 0x9000, scoped, tag = 'internal scratch']
  #allocation2 [shape = 'f32[1]{0:T(128)S(6)}', space=smem, size = 0x200, scoped, tag = 'scoped memory for tpu_custom_call.1']
  %s0 = inlined_call_operand.vmem [shape: f32[1,3], index: 0, kind: input, shape index: {}]
  %s1 = inlined_call_operand.<no memory space> [shape: f32[1], index: 1, kind: input, shape index: {}]
  %s2 = inlined_call_operand.vmem [shape: f32[2,3,256], index: 2, kind: input, shape index: {}]
  %s3 = inlined_call_operand.hbm [shape: f32[2,1,256], index: 3, kind: output, shape index: {}]
  %s4 = sld [smem:[#allocation0]]
  $region49: #{tpu_custom_call.1} parent=0
    _
  %s6 = ssub.s32 1, %s4
  %s7 = scalar_select 0, %s6, %s4
  %8 = sst [smem:[#allocation2]] %s1
  $region1: #{tpu_custom_call.1} parent=0
    #allocation3 [shape = 'u8[512]{0}', space=smem, size = 0x200, scoped, tag = 'input window, operand 0, single buffered']
    #allocation4 [shape = 's32[2]{0}', space=sflag, size = 0x8, scoped, tag = 'scoped memory for tpu_custom_call.1']
    #allocation5 [shape = 's32[2]{0}', space=sflag, size = 0x8, scoped, tag = 'scoped memory for tpu_custom_call.1']
    #allocation6 [shape = 'u8[2048]{0}', space=vmem, size = 0x800, scoped, tag = 'output window, operand 0']
    %9 = vsyncpa [#allocation5], 0
    %10 = vsyncpa [#allocation4], 0
    %s11 = scalar_lea.sflag [#allocation4], 1
    %12 = vsyncpa %s11, 0
    loop: start=0, step=1, limit=4
    $region2: #{tpu_custom_call.1} parent=1 // loop_pre_header
      _
    $region3: #{tpu_custom_call.1} parent=1 // loop_header
      %s14 = sphi 0, %s18
      %p15 = scmp.ge.s32.totalorder %s14, 4
      %s21 = sphi 0, %s33
      %s22 = sphi 0, %s29
      %s23 = sphi 0, %s21
      %s24 = sphi 0, %s22
      %s25 = sphi 0, %s23
      %s26 = sphi 0, %s24
      %s34 = sphi 0, %s34
      %s36 = sphi 0, %s34
      %s37 = sphi 0, %s36
      %s51 = sphi 0, %s37
      %s55 = sphi 0, %s55
      %s57 = sphi 0, %s55
      %s58 = sphi 0, %s57
      %s72 = sphi 0, %s58
      %s80 = sphi 0, %s82
      %s83 = sphi 0, %s80
      %s84 = sphi 0, %s83
      %s100 = sphi 0, %s84
      %s108 = sphi 0, %s110
      %s111 = sphi 0, %s108
      %s112 = sphi 0, %s111
      %s128 = sphi 0, %s112
    $region4: #{tpu_custom_call.1} parent=1 // loop_header_branch
      %17 = sbr.rel (%p15) target = $region8
    $region5: #{tpu_custom_call.1} parent=1 // loop_body
      %s19 = ssub.s32 %s14, 1
      %s20 = ssub.s32 %s14, 2
      %s27 = sadd.s32 1, %s22
      %p28 = scmp.ge.s32.totalorder %s27, 1
      %s29 = scalar_select %p28, 0, %s27
      %s30 = sadd.s32 1, %s21
      %s31 = scalar_select %p28, %s30, %s21
      %p32 = scmp.ge.s32.totalorder %s31, 2
      %s33 = scalar_select %p32, 0, %s31
      %s35 = sadd.s32 %s34, 1
      %p38 = scmp.eq.s32.totalorder %s14, 1
      %p39 = scmp.ne.s32.totalorder %s34, %s36
      %p40 = scmp.eq.s32.totalorder %s14, 0
      %p41 = por %p39, %p40
      %p42 = scmp.ne.s32.totalorder %s34, %s36
      %p43 = scmp.eq.s32.totalorder %s19, 1
      %p44 = por %p42, %p43
      %p45 = scmp.ne.s32.totalorder %s36, %s37
      %p46 = scmp.eq.s32.totalorder %s19, 0
      %p47 = por %p45, %p46
      %p48 = scmp.ne.s32.totalorder %s36, %s37
      %p49 = scmp.eq.s32.totalorder %s20, 1
      %p50 = por %p48, %p49
      %p52 = scmp.ne.s32.totalorder %s37, %s51
      %p53 = scmp.eq.s32.totalorder %s20, 0
      %p54 = por %p52, %p53
      %s56 = sadd.s32 %s55, 1
      %p59 = scmp.eq.s32.totalorder %s14, 1
      %p60 = scmp.ne.s32.totalorder %s55, %s57
      %p61 = scmp.eq.s32.totalorder %s14, 0
      %p62 = por %p60, %p61
      %p63 = scmp.ne.s32.totalorder %s55, %s57
      %p64 = scmp.eq.s32.totalorder %s19, 1
      %p65 = por %p63, %p64
      %p66 = scmp.ne.s32.totalorder %s57, %s58
      %p67 = scmp.eq.s32.totalorder %s19, 0
      %p68 = por %p66, %p67
      %p69 = scmp.ne.s32.totalorder %s57, %s58
      %p70 = scmp.eq.s32.totalorder %s20, 1
      %p71 = por %p69, %p70
      %p73 = scmp.ne.s32.totalorder %s58, %s72
      %p74 = scmp.eq.s32.totalorder %s20, 0
      %p75 = por %p73, %p74
      %s76 = ssub.s32 %s21, %s33
      %s77 = ssub.s32 %s22, %s29
      %s78 = sor.u32 %s76, %s77
      %p79 = scmp.eq.s32.totalorder %s78, 0
      %s81 = sadd.s32 %s80, 1
      %s82 = scalar_select %p79, %s80, %s81
      %p85 = pneg %p79
      %p86 = scmp.eq.s32.totalorder %s14, 1
      %p87 = por %p85, %p86
      %p88 = scmp.ne.s32.totalorder %s80, %s83
      %p89 = scmp.eq.s32.totalorder %s14, 0
      %p90 = por %p88, %p89
      %p91 = scmp.ne.s32.totalorder %s80, %s83
      %p92 = scmp.eq.s32.totalorder %s19, 1
      %p93 = por %p91, %p92
      %p94 = scmp.ne.s32.totalorder %s83, %s84
      %p95 = scmp.eq.s32.totalorder %s19, 0
      %p96 = por %p94, %p95
      %p97 = scmp.ne.s32.totalorder %s83, %s84
      %p98 = scmp.eq.s32.totalorder %s20, 1
      %p99 = por %p97, %p98
      %p101 = scmp.ne.s32.totalorder %s84, %s100
      %p102 = scmp.eq.s32.totalorder %s20, 0
      %p103 = por %p101, %p102
      %s104 = ssub.s32 %s21, %s33
      %s105 = ssub.s32 %s22, %s29
      %s106 = sor.u32 %s104, %s105
      %p107 = scmp.eq.s32.totalorder %s106, 0
      %s109 = sadd.s32 %s108, 1
      %s110 = scalar_select %p107, %s108, %s109
      %p113 = pneg %p107
      %p114 = scmp.eq.s32.totalorder %s14, 1
      %p115 = por %p113, %p114
      %p116 = scmp.ne.s32.totalorder %s108, %s111
      %p117 = scmp.eq.s32.totalorder %s14, 0
      %p118 = por %p116, %p117
      %p119 = scmp.ne.s32.totalorder %s108, %s111
      %p120 = scmp.eq.s32.totalorder %s19, 1
      %p121 = por %p119, %p120
      %p122 = scmp.ne.s32.totalorder %s111, %s112
      %p123 = scmp.eq.s32.totalorder %s19, 0
      %p124 = por %p122, %p123
      %p125 = scmp.ne.s32.totalorder %s111, %s112
      %p126 = scmp.eq.s32.totalorder %s20, 1
      %p127 = por %p125, %p126
      %p129 = scmp.ne.s32.totalorder %s112, %s128
      %p130 = scmp.eq.s32.totalorder %s20, 0
      %p131 = por %p129, %p130
      %p132 = scmp.le.s32.totalorder 1, %s14
      %p133 = scmp.lt.s32.totalorder %s14, 3
      %p134 = pnand %p132, %p133
      %p135 = pneg %p134
      // Predicated region
      $region9: #{tpu_custom_call.1} parent=5 // pred_check
        _
      $region10: #{tpu_custom_call.1} parent=5 // pred_check_branch
        %137 = sbr.rel (%p134) target = $region12
      $region11: #{tpu_custom_call.1} parent=5 // pred_region
        %s138 = ssub.s32 %s14, 1
        // Predicated region
        $region13: #{tpu_custom_call.1} parent=11 // pred_check
          %p139 = pneg %p47
        $region14: #{tpu_custom_call.1} parent=11 // pred_check_branch
          %141 = sbr.rel (%p139) target = $region16
        $region15: #{tpu_custom_call.1} parent=11 // pred_region
          %143 = vsyncadd [#allocation5], 0
          %s145 = sshll.u32 %s0, 4
          %s146 = int_to_ptr.vmem [resolvable:$true] %s145
          %148 = dma.vmem_to_smem %s146, 16, [#allocation3], [#allocation5]
        $region16: #{tpu_custom_call.1} parent=11 // pred_fallthru
          _
        // Predicated region
        $region17: #{tpu_custom_call.1} parent=11 // pred_check
          %p149 = pneg %p68
        $region18: #{tpu_custom_call.1} parent=11 // pred_check_branch
          %151 = sbr.rel (%p149) target = $region20
        $region19: #{tpu_custom_call.1} parent=11 // pred_region
          _
        $region20: #{tpu_custom_call.1} parent=11 // pred_fallthru
          _
      $region12: #{tpu_custom_call.1} parent=5 // pred_fallthru
        _
      %p152 = scmp.lt.s32.totalorder %s14, 2
      // Predicated region
      $region21: #{tpu_custom_call.1} parent=5 // pred_check
        %p153 = pneg %p152
      $region22: #{tpu_custom_call.1} parent=5 // pred_check_branch
        %155 = sbr.rel (%p153) target = $region24
      $region23: #{tpu_custom_call.1} parent=5 // pred_region
        // Predicated region
        $region25: #{tpu_custom_call.1} parent=23 // pred_check
          %p156 = pneg %p90
        $region26: #{tpu_custom_call.1} parent=23 // pred_check_branch
          %158 = sbr.rel (%p156) target = $region28
        $region27: #{tpu_custom_call.1} parent=23 // pred_region
          %s159 = smul.u32 2, %s22
          %p160 = scmp.lt.s32.totalorder %s21, 1
          %s161 = scalar_select %p160, %s21, 1
          %p162 = scmp.lt.s32.totalorder %s159, 1
          %s163 = scalar_select %p162, %s159, 1
          %s164 = smul.addr %s161, 2
          %s165 = sadd.s32 %s163, %s164
          %s166 = smul.addr %s165, 4
          %s167 = scalar_lea.vmem %s2, %s166
          %s168 = smul.u32 2, %s22
        $region28: #{tpu_custom_call.1} parent=23 // pred_fallthru
          _
      $region24: #{tpu_custom_call.1} parent=5 // pred_fallthru
        _
      %p169 = scmp.le.s32.totalorder 1, %s14
      %p170 = scmp.lt.s32.totalorder %s14, 3
      %p171 = pnand %p169, %p170
      %p172 = pneg %p171
      // Predicated region
      $region29: #{tpu_custom_call.1} parent=5 // pred_check
        _
      $region30: #{tpu_custom_call.1} parent=5 // pred_check_branch
        %174 = sbr.rel (%p171) target = $region32
      $region31: #{tpu_custom_call.1} parent=5 // pred_region
        %s175 = ssub.s32 %s14, 1
        // Predicated region
        $region33: #{tpu_custom_call.1} parent=31 // pred_check
          %p176 = pneg %p47
        $region34: #{tpu_custom_call.1} parent=31 // pred_check_branch
          %178 = sbr.rel (%p176) target = $region36
        $region35: #{tpu_custom_call.1} parent=31 // pred_region
          %180 = dma.done [#allocation5], 16
        $region36: #{tpu_custom_call.1} parent=31 // pred_fallthru
          _
        %181 = sfence
        %p182 = pneg %p47
        %p183 = pneg %p44
        %p184 = pneg %p68
        %p185 = pneg %p65
        %s186 = smul.u32 2, %s24
        %p187 = scmp.lt.s32.totalorder %s23, 1
        %s188 = scalar_select %p187, %s23, 1
        %p189 = scmp.lt.s32.totalorder %s186, 1
        %s190 = scalar_select %p189, %s186, 1
        %s191 = smul.addr %s188, 2
        %s192 = sadd.s32 %s190, %s191
        %s193 = smul.addr %s192, 4
        %s194 = scalar_lea.vmem %s2, %s193
        %p195 = pneg %p96
        %p196 = pneg %p93
        %p197 = pneg %p124
        %p198 = pneg %p121
        %s199 = sand.u32 %s111, 1
        %s200 = scalar_lea.sflag [#allocation4], %s199
        %s201 = sand.u32 %s111, 1
        %s202 = smul.addr %s201, 2
        %s203 = scalar_lea.vmem [#allocation6], %s202
        %s204 = smul.u32 2, %s24
        %p205 = scmp.lt.s32.totalorder %s23, 1
        %s206 = scalar_select %p205, %s23, 1
        %p207 = scmp.lt.s32.totalorder %s204, 1
        %s208 = scalar_select %p207, %s204, 1
        %s209 = smul.addr %s206, 2
        %s210 = sadd.s32 %s208, %s209
        %s211 = smul.addr %s210, 4
        %s212 = scalar_lea.vmem %s2, %s211
        %s213 = smul.u32 2, %s24
        %s214 = smul.u32 2, %s24
        %v215 = vld [vmem:[%s212] sm:$0x77]
        %s216 = sld [smem:[#allocation3]]
        %v217 = vstv %s216
        %v218 = vmul.f32 %v215, %v217
        %s219 = sld [smem:[#allocation3 + $0x1]]
        %v220 = vstv %s219
        %v221 = vmul.f32 %v215, %v220
        %v223 = vrot.slane %v221, 5
        %v224 = vrot.slane %v223, 4
        %v226 = vadd.f32 %v218, %v224
        %s227 = sld [smem:[#allocation3 + $0x2]]
        %v228 = vstv %s227
        %v229 = vmul.f32 %v215, %v228
        %v231 = vrot.slane %v229, 6
        %v232 = vrot.slane %v231, 4
        %v234 = vadd.f32 %v226, %v232
        %s235 = sld [smem:[#allocation2]]
        %v236 = vstv %s235
        %v237 = vadd.f32 %v234, %v236
        %v238 = vmax.f32 %v237, 0.0
        %v240 = vrot.slane %v238, 3
        %vm241 = vcmask 1040384
        %v242 = vsel %vm241, %v238, %v240
        %v244 = vlaneseq
        %vm245 = vcmp.ge.s32.totalorder %v244, 0
        %vm246 = vcmp.lt.s32.totalorder %v244, 256
        %vm247 = vmand %vm245, %vm246
        %248 = vst.msk [vmem:[%s203] sm:$0x3] %vm247, %v242
        %s249 = sand.u32 %s111, 1
        %s250 = scalar_lea.sflag [#allocation4], %s249
        %s251 = sand.u32 %s111, 1
        %s252 = smul.addr %s251, 2
        %s253 = scalar_lea.vmem [#allocation6], %s252
        // Predicated region
        $region37: #{tpu_custom_call.1} parent=31 // pred_check
          %p254 = pneg %p121
        $region38: #{tpu_custom_call.1} parent=31 // pred_check_branch
          %256 = sbr.rel (%p254) target = $region40
        $region39: #{tpu_custom_call.1} parent=31 // pred_region
          %s257 = smul.u32 2, %s24
          %259 = vsyncadd %s250, 0
          %s260 = smul.addr %s23, 2
          %s261 = sadd.s32 %s257, %s260
          %s262 = scalar_lea.hbm %s3, %s261
          %s264 = sshll.u32 %s253, 4
          %s265 = int_to_ptr.vmem [resolvable:$true] %s264
          %s266 = sshll.u32 %s262, 4
          %s267 = int_to_ptr.hbm [resolvable:$true] %s266
          %269 = dma.vmem_to_hbm [thread:$0]  %s265, 32, %s267, %s250
        $region40: #{tpu_custom_call.1} parent=31 // pred_fallthru
          _
      $region32: #{tpu_custom_call.1} parent=5 // pred_fallthru
        _
      %p270 = scmp.le.s32.totalorder 2, %s14
      // Predicated region
      $region41: #{tpu_custom_call.1} parent=5 // pred_check
        %p271 = pneg %p270
      $region42: #{tpu_custom_call.1} parent=5 // pred_check_branch
        %273 = sbr.rel (%p271) target = $region44
      $region43: #{tpu_custom_call.1} parent=5 // pred_region
        %s274 = ssub.s32 %s14, 2
        // Predicated region
        $region45: #{tpu_custom_call.1} parent=43 // pred_check
          %p275 = pneg %p127
        $region46: #{tpu_custom_call.1} parent=43 // pred_check_branch
          %277 = sbr.rel (%p275) target = $region48
        $region47: #{tpu_custom_call.1} parent=43 // pred_region
          %s278 = sand.u32 %s112, 1
          %s279 = scalar_lea.sflag [#allocation4], %s278
          %s280 = sand.u32 %s112, 1
          %s281 = smul.addr %s280, 2
          %s282 = scalar_lea.vmem [#allocation6], %s281
          %284 = dma.done %s279, 32
        $region48: #{tpu_custom_call.1} parent=43 // pred_fallthru
          _
      $region44: #{tpu_custom_call.1} parent=5 // pred_fallthru
        _
    $region6: #{tpu_custom_call.1} parent=1 // loop_footer
      %s18 = sadd.s32 1, %s14
    $region7: #{tpu_custom_call.1} parent=1 // loop_footer_branch
      %13 = sbr.rel target = $region3
    $region8: #{tpu_custom_call.1} parent=1 // loop_exit
      _
    %285 = vsyncpa [#allocation4], 1
    %s286 = scalar_lea.sflag [#allocation4], 1
    %287 = vsyncpa %s286, 1
    %288 = vsyncpa [#allocation5], 1
    %s289 = scalar_lea.sflag [#allocation5], 1
    %290 = vsyncpa %s289, 1

</llo_original>
